<compile_context>
chip_gen: v7x
topology: tpu7x:2x2x1
jax: 0.10.0
libtpu: 0.0.40
codegen_flags: <defaults>
</compile_context>

<pallas_src>
import functools

import jax
import jax.numpy as jnp
import numpy as np
from jax.experimental import pallas as pl
from jax.experimental.pallas import tpu as pltpu

BN_EPS = 1e-5
ACT_G = 0.2            # Activation_op gain: tanh(0.2 * x)
LANE = 128
_MIB = 2 ** 20


def _round_up(n, m):
    return ((n + m - 1) // m) * m


def _vmem_budget_bytes():
    """Per-generation VMEM budget: physical capacity minus 16 MiB headroom."""
    phys = 64 * _MIB
    try:
        info = pltpu.get_tpu_info()
        phys = int(getattr(info, "vmem_capacity_bytes", phys)) or phys
    except Exception:
        pass
    return int(min(max(phys - 16 * _MIB, 32 * _MIB), 112 * _MIB))


# ---------------------------------------------------------------------------
# Fused single-block kernels (whole batch resident in VMEM).
# ---------------------------------------------------------------------------
def _fused_full_kernel(x_ref, w1_ref, b1_ref, g1_ref, be1_ref,
                       w2_ref, b2_ref, g2_ref, be2_ref,
                       y_ref, loss_ref, *, inv_b, inv_n, tanh_dtype):
    mm_dtype = w1_ref.dtype

    # encoder: Linear -> BatchNorm1d (train stats, biased var) -> tanh(0.2*)
    h = jnp.dot(x_ref[...].astype(mm_dtype), w1_ref[...],
                preferred_element_type=jnp.float32) + b1_ref[...]
    mu1 = jnp.sum(h, axis=0, keepdims=True) * inv_b
    var1 = jnp.sum((h - mu1) ** 2, axis=0, keepdims=True) * inv_b
    a1 = g1_ref[...] * jax.lax.rsqrt(var1 + BN_EPS)   # g1/be1 carry the 0.2 gain
    c1 = be1_ref[...] - mu1 * a1
    y = jnp.tanh((h * a1 + c1).astype(tanh_dtype)).astype(jnp.float32)
    y_ref[...] = y.astype(y_ref.dtype)

    # decoder: Linear -> BatchNorm1d -> tanh(0.2*)  (x_rec never leaves VMEM)
    d = jnp.dot(y.astype(mm_dtype), w2_ref[...],
                preferred_element_type=jnp.float32) + b2_ref[...]
    mu2 = jnp.sum(d, axis=0, keepdims=True) * inv_b
    var2 = jnp.sum((d - mu2) ** 2, axis=0, keepdims=True) * inv_b
    a2 = g2_ref[...] * jax.lax.rsqrt(var2 + BN_EPS)
    c2 = be2_ref[...] - mu2 * a2
    xr = jnp.tanh((d * a2 + c2).astype(tanh_dtype)).astype(jnp.float32)

    # MSE loss (padded columns of x and xr are both exactly 0).  x is re-read
    # here so its f32 live range does not span both matmuls.
    diff = xr - x_ref[...]
    loss_ref[...] = (jnp.sum(diff * diff) * inv_n).reshape(1, 1)


def _fused_encoder_kernel(x_ref, w1_ref, b1_ref, g1_ref, be1_ref, y_ref,
                          *, inv_b, tanh_dtype):
    mm_dtype = w1_ref.dtype
    h = jnp.dot(x_ref[...].astype(mm_dtype), w1_ref[...],
                preferred_element_type=jnp.float32) + b1_ref[...]
    mu = jnp.sum(h, axis=0, keepdims=True) * inv_b
    var = jnp.sum((h - mu) ** 2, axis=0, keepdims=True) * inv_b
    a = g1_ref[...] * jax.lax.rsqrt(var + BN_EPS)
    c = be1_ref[...] - mu * a
    y_ref[...] = jnp.tanh((h * a + c).astype(tanh_dtype)).astype(y_ref.dtype)


# ---------------------------------------------------------------------------
# Batch-tiled two-pass-BN pipeline (used when the batch does not fit VMEM).
#   pass A : encoder matmul, stream h, accumulate per-column sum / sum-of-sq
#   pass B : BN1-apply + tanh -> y, decoder matmul, stream d, accumulate stats
#   pass C : BN2-apply + tanh + masked MSE accumulation
#   pass B': BN1-apply + tanh only (encoder-only path, "parallel" grid axis)
# ---------------------------------------------------------------------------
def _row_mask(bm, n_valid):
    row = pl.program_id(0) * bm + jax.lax.broadcasted_iota(jnp.int32, (bm, 1), 0)
    return row < n_valid


def _bn_coeffs(s_ref, q_ref, g_ref, be_ref, inv_b):
    mu = s_ref[...] * inv_b
    var = jnp.maximum(q_ref[...] * inv_b - mu * mu, 0.0)
    a = g_ref[...] * jax.lax.rsqrt(var + BN_EPS)
    return a, be_ref[...] - mu * a


def _enc_stats_kernel(x_ref, w1_ref, b1_ref, h_ref, s1_ref, q1_ref,
                      *, bm, n_valid):
    h = jnp.dot(x_ref[...].astype(w1_ref.dtype), w1_ref[...],
                preferred_element_type=jnp.float32) + b1_ref[...]
    h_ref[...] = h
    hm = jnp.where(_row_mask(bm, n_valid), h, 0.0)

    @pl.when(pl.program_id(0) == 0)
    def _():
        s1_ref[...] = jnp.zeros_like(s1_ref)
        q1_ref[...] = jnp.zeros_like(q1_ref)

    s1_ref[...] += jnp.sum(hm, axis=0, keepdims=True)
    q1_ref[...] += jnp.sum(hm * hm, axis=0, keepdims=True)


def _bn1_dec_stats_kernel(h_ref, s1_ref, q1_ref, g1_ref, be1_ref,
                          w2_ref, b2_ref,
                          y_ref, d_ref, s2_ref, q2_ref,
                          *, bm, n_valid, inv_b, tanh_dtype):
    a1, c1 = _bn_coeffs(s1_ref, q1_ref, g1_ref, be1_ref, inv_b)
    y = jnp.tanh((h_ref[...] * a1 + c1).astype(tanh_dtype)).astype(jnp.float32)
    y_ref[...] = y.astype(y_ref.dtype)

    d = jnp.dot(y.astype(w2_ref.dtype), w2_ref[...],
                preferred_element_type=jnp.float32) + b2_ref[...]
    d_ref[...] = d
    dm = jnp.where(_row_mask(bm, n_valid), d, 0.0)

    @pl.when(pl.program_id(0) == 0)
    def _():
        s2_ref[...] = jnp.zeros_like(s2_ref)
        q2_ref[...] = jnp.zeros_like(q2_ref)

    s2_ref[...] += jnp.sum(dm, axis=0, keepdims=True)
    q2_ref[...] += jnp.sum(dm * dm, axis=0, keepdims=True)


def _bn2_loss_kernel(d_ref, x_ref, s2_ref, q2_ref, g2_ref, be2_ref, loss_ref,
                     *, bm, n_valid, inv_b, inv_n, tanh_dtype):
    a2, c2 = _bn_coeffs(s2_ref, q2_ref, g2_ref, be2_ref, inv_b)
    xr = jnp.tanh((d_ref[...] * a2 + c2).astype(tanh_dtype)).astype(jnp.float32)
    diff = jnp.where(_row_mask(bm, n_valid), xr - x_ref[...], 0.0)

    @pl.when(pl.program_id(0) == 0)
    def _():
        loss_ref[...] = jnp.zeros_like(loss_ref)

    loss_ref[...] += (jnp.sum(diff * diff) * inv_n).reshape(1, 1)


def _bn1_apply_kernel(h_ref, s1_ref, q1_ref, g1_ref, be1_ref, y_ref,
                      *, inv_b, tanh_dtype):
    a1, c1 = _bn_coeffs(s1_ref, q1_ref, g1_ref, be1_ref, inv_b)
    y_ref[...] = jnp.tanh((h_ref[...] * a1 + c1).astype(tanh_dtype)
                          ).astype(y_ref.dtype)


# ---------------------------------------------------------------------------
# One-time parameter preparation (transpose, lane-pad, fold 0.2 gain, dtype).
# bf16 matmul weights are worthwhile on all generations (MXU is natively bf16);
# element-wise BN / tanh / loss math stays f32 regardless.
# ---------------------------------------------------------------------------
def prepare_params(params, *, matmul_dtype=jnp.float32):
    d_out, d_in = params["w1"].shape
    d_in_p = _round_up(d_in, LANE)
    d_out_p = _round_up(d_out, LANE)

    def pad2(w, rows, cols):
        return jnp.pad(w, ((0, rows - w.shape[0]), (0, cols - w.shape[1])))

    def padrow(v, n):
        return jnp.pad(v, (0, n - v.shape[0])).reshape(1, n)

    return {
        "w1_t": pad2(params["w1"].T, d_in_p, d_out_p).astype(matmul_dtype),
        "b1": padrow(params["b1"], d_out_p),
        "g1": padrow(ACT_G * params["bn1_gamma"], d_out_p),
        "be1": padrow(ACT_G * params["bn1_beta"], d_out_p),
        "w2_t": pad2(params["w2"].T, d_out_p, d_in_p).astype(matmul_dtype),
        "b2": padrow(params["b2"], d_in_p),
        "g2": padrow(ACT_G * params["bn2_gamma"], d_in_p),
        "be2": padrow(ACT_G * params["bn2_beta"], d_in_p),
        "d_in": d_in, "d_out": d_out, "d_in_p": d_in_p, "d_out_p": d_out_p,
    }


# ---------------------------------------------------------------------------
# Wrapper paths.
# ---------------------------------------------------------------------------
def _fused_bytes(B, d_in_p, d_out_p, mm_bytes, want_decoder):
    w = mm_bytes * d_in_p * d_out_p * (2 if want_decoder else 1)
    vec = 4 * 8 * (d_in_p + d_out_p)
    if want_decoder:
        rows = 4 * (3 * d_in_p + 2 * d_out_p) + mm_bytes * (d_in_p + d_out_p)
    else:
        rows = 4 * (d_in_p + 2 * d_out_p) + mm_bytes * d_in_p
    return w + vec + B * rows


def _forward_fused(x_p, prepped, B, *, want_decoder, y_dtype, tanh_dtype, budget):
    d_out_p = prepped["d_out_p"]
    vmem = pl.BlockSpec(memory_space=pltpu.MemorySpace.VMEM)
    cp = pltpu.CompilerParams(vmem_limit_bytes=budget)
    inv_b = 1.0 / B

    if want_decoder:
        kernel = functools.partial(_fused_full_kernel, inv_b=inv_b,
                                   inv_n=1.0 / (B * prepped["d_in"]),
                                   tanh_dtype=tanh_dtype)
        y_pad, loss = pl.pallas_call(
            kernel,
            out_shape=(jax.ShapeDtypeStruct((B, d_out_p), y_dtype),
                       jax.ShapeDtypeStruct((1, 1), jnp.float32)),
            in_specs=[vmem] * 9,
            out_specs=(vmem, vmem),
            compiler_params=cp,
        )(x_p, prepped["w1_t"], prepped["b1"], prepped["g1"], prepped["be1"],
          prepped["w2_t"], prepped["b2"], prepped["g2"], prepped["be2"])
        return y_pad, loss[0, 0]

    kernel = functools.partial(_fused_encoder_kernel, inv_b=inv_b,
                               tanh_dtype=tanh_dtype)
    y_pad = pl.pallas_call(
        kernel,
        out_shape=jax.ShapeDtypeStruct((B, d_out_p), y_dtype),
        in_specs=[vmem] * 5,
        out_specs=vmem,
        compiler_params=cp,
    )(x_p, prepped["w1_t"], prepped["b1"], prepped["g1"], prepped["be1"])
    return y_pad, None


def _forward_tiled(x_p, prepped, B, *, want_decoder, y_dtype, tanh_dtype,
                   budget, bm):
    d_in_p, d_out_p = prepped["d_in_p"], prepped["d_out_p"]
    bm = min(int(bm), _round_up(B, 8))
    bm = max(8, (bm // 8) * 8)
    B_pad = _round_up(B, bm)
    if B_pad != B:
        x_p = jnp.pad(x_p, ((0, B_pad - B), (0, 0)))
    n_t = B_pad // bm
    inv_b = 1.0 / B

    cp_arb = pltpu.CompilerParams(dimension_semantics=("arbitrary",),
                                  vmem_limit_bytes=budget)
    cp_par = pltpu.CompilerParams(dimension_semantics=("parallel",),
                                  vmem_limit_bytes=budget)

    row_in = pl.BlockSpec((bm, d_in_p), lambda i: (i, 0))
    row_hid = pl.BlockSpec((bm, d_out_p), lambda i: (i, 0))
    vec_in = pl.BlockSpec((1, d_in_p), lambda i: (0, 0))
    vec_hid = pl.BlockSpec((1, d_out_p), lambda i: (0, 0))
    w1_spec = pl.BlockSpec((d_in_p, d_out_p), lambda i: (0, 0))
    w2_spec = pl.BlockSpec((d_out_p, d_in_p), lambda i: (0, 0))

    # pass A: encoder matmul + BN1 statistics
    h, s1, q1 = pl.pallas_call(
        functools.partial(_enc_stats_kernel, bm=bm, n_valid=B),
        grid=(n_t,),
        in_specs=[row_in, w1_spec, vec_hid],
        out_specs=(row_hid, vec_hid, vec_hid),
        out_shape=(jax.ShapeDtypeStruct((B_pad, d_out_p), jnp.float32),
                   jax.ShapeDtypeStruct((1, d_out_p), jnp.float32),
                   jax.ShapeDtypeStruct((1, d_out_p), jnp.float32)),
        compiler_params=cp_arb,
    )(x_p, prepped["w1_t"], prepped["b1"])

    if not want_decoder:
        y_pad = pl.pallas_call(
            functools.partial(_bn1_apply_kernel, inv_b=inv_b,
                              tanh_dtype=tanh_dtype),
            grid=(n_t,),
            in_specs=[row_hid, vec_hid, vec_hid, vec_hid, vec_hid],
            out_specs=row_hid,
            out_shape=jax.ShapeDtypeStruct((B_pad, d_out_p), y_dtype),
            compiler_params=cp_par,
        )(h, s1, q1, prepped["g1"], prepped["be1"])
        return y_pad[:B], None

    # pass B: BN1-apply + tanh -> y, decoder matmul + BN2 statistics
    y_pad, d_lin, s2, q2 = pl.pallas_call(
        functools.partial(_bn1_dec_stats_kernel, bm=bm, n_valid=B,
                          inv_b=inv_b, tanh_dtype=tanh_dtype),
        grid=(n_t,),
        in_specs=[row_hid, vec_hid, vec_hid, vec_hid, vec_hid, w2_spec, vec_in],
        out_specs=(row_hid, row_in, vec_in, vec_in),
        out_shape=(jax.ShapeDtypeStruct((B_pad, d_out_p), y_dtype),
                   jax.ShapeDtypeStruct((B_pad, d_in_p), jnp.float32),
                   jax.ShapeDtypeStruct((1, d_in_p), jnp.float32),
                   jax.ShapeDtypeStruct((1, d_in_p), jnp.float32)),
        compiler_params=cp_arb,
    )(h, s1, q1, prepped["g1"], prepped["be1"], prepped["w2_t"], prepped["b2"])

    # pass C: BN2-apply + tanh + masked MSE accumulation
    loss = pl.pallas_call(
        functools.partial(_bn2_loss_kernel, bm=bm, n_valid=B, inv_b=inv_b,
                          inv_n=1.0 / (B * prepped["d_in"]),
                          tanh_dtype=tanh_dtype),
        grid=(n_t,),
        in_specs=[row_in, row_in, vec_in, vec_in, vec_in, vec_in],
        out_specs=pl.BlockSpec((1, 1), lambda i: (0, 0)),
        out_shape=jax.ShapeDtypeStruct((1, 1), jnp.float32),
        compiler_params=cp_arb,
    )(d_lin, x_p, s2, q2, prepped["g2"], prepped["be2"])

    return y_pad[:B], loss[0, 0]


def linear_autoencoder_last(x, prepped, *, training=True, is_reconstruct=True,
                            y_dtype=jnp.float32, tanh_dtype=jnp.float32,
                            block_rows=None):
    """Mirrors LinearAutoEncoderLast.forward(x, is_reconstruct)."""
    x = jax.lax.stop_gradient(x).astype(jnp.float32)          # x.detach()
    B, d_in = x.shape
    if d_in != prepped["d_in"]:
        raise ValueError("input feature dim mismatch")
    if B < 2:
        raise ValueError("training-mode BatchNorm1d requires batch size >= 2")

    d_in_p, d_out = prepped["d_in_p"], prepped["d_out"]
    x_p = x if d_in_p == d_in else jnp.pad(x, ((0, 0), (0, d_in_p - d_in)))

    want_decoder = bool(training and is_reconstruct)
    mm_bytes = prepped["w1_t"].dtype.itemsize
    budget = _vmem_budget_bytes()
    use_tiled = (block_rows is not None) or (
        _fused_bytes(B, d_in_p, prepped["d_out_p"], mm_bytes, want_decoder) > budget)

    if use_tiled:
        y_pad, loss = _forward_tiled(
            x_p, prepped, B, want_decoder=want_decoder, y_dtype=y_dtype,
            tanh_dtype=tanh_dtype, budget=budget,
            bm=(block_rows if block_rows is not None else 256))
    else:
        y_pad, loss = _forward_fused(
            x_p, prepped, B, want_decoder=want_decoder, y_dtype=y_dtype,
            tanh_dtype=tanh_dtype, budget=budget)

    y = jax.lax.stop_gradient(y_pad[:, :d_out])                # y.detach()
    if want_decoder:
        return y, loss
    return y


# ---------------------------------------------------------------------------
# Test harness
# ---------------------------------------------------------------------------
def _init_params(key, input_dim, output_dim):
    k1, k2, k3, k4 = jax.random.split(key, 4)
    bound1 = 1.0 / np.sqrt(input_dim)
    bound2 = 1.0 / np.sqrt(output_dim)
    return {
        "w1": jax.random.uniform(k1, (output_dim, input_dim), jnp.float32,
                                 -bound1, bound1),
        "b1": jax.random.uniform(k2, (output_dim,), jnp.float32, -bound1, bound1),
        "bn1_gamma": jnp.ones((output_dim,), jnp.float32),
        "bn1_beta": jnp.zeros((output_dim,), jnp.float32),
        "w2": jax.random.uniform(k3, (input_dim, output_dim), jnp.float32,
                                 -bound2, bound2),
        "b2": jax.random.uniform(k4, (input_dim,), jnp.float32, -bound2, bound2),
        "bn2_gamma": jnp.ones((input_dim,), jnp.float32),
        "bn2_beta": jnp.zeros((input_dim,), jnp.float32),
    }


def _reference(x, p):
    """Pure-JAX reference of the PyTorch forward (training, is_reconstruct)."""
    h = x @ p["w1"].T + p["b1"]
    mu, var = h.mean(0), ((h - h.mean(0)) ** 2).mean(0)
    y = jnp.tanh(ACT_G * ((h - mu) / jnp.sqrt(var + BN_EPS)
                          * p["bn1_gamma"] + p["bn1_beta"]))
    d = y @ p["w2"].T + p["b2"]
    mu2, var2 = d.mean(0), ((d - d.mean(0)) ** 2).mean(0)
    xr = jnp.tanh(ACT_G * ((d - mu2) / jnp.sqrt(var2 + BN_EPS)
                           * p["bn2_gamma"] + p["bn2_beta"]))
    return y, jnp.mean((xr - x) ** 2)


if __name__ == "__main__":
    INPUT_DIM, OUTPUT_DIM = 128, 64
    key = jax.random.PRNGKey(0)
    kx, kp, kx2 = jax.random.split(key, 3)
    params = _init_params(kp, INPUT_DIM, OUTPUT_DIM)

    # ---- fused single-block path (B=8), f32 matmuls: tight check ----------
    B = 8
    x = jax.random.normal(kx, (B, INPUT_DIM), jnp.float32)
    y_ref, loss_ref = _reference(x, params)

    prepped_f32 = prepare_params(params, matmul_dtype=jnp.float32)
    y, loss = linear_autoencoder_last(x, prepped_f32)
    jax.block_until_ready((y, loss))
    np.testing.assert_allclose(np.asarray(y), np.asarray(y_ref),
                               atol=2e-5, rtol=2e-5)
    np.testing.assert_allclose(np.asarray(loss), np.asarray(loss_ref),
                               atol=2e-5, rtol=2e-5)

    # ---- encoder-only kernel (is_reconstruct=False) ------------------------
    y_only = linear_autoencoder_last(x, prepped_f32, is_reconstruct=False)
    jax.block_until_ready(y_only)
    np.testing.assert_allclose(np.asarray(y_only), np.asarray(y_ref),
                               atol=2e-5, rtol=2e-5)

    # ---- bf16 matmul weights + bf16 y output: loose check ------------------
    prepped_bf16 = prepare_params(params, matmul_dtype=jnp.bfloat16)
    y16, loss16 = linear_autoencoder_last(x, prepped_bf16, y_dtype=jnp.bfloat16)
    jax.block_until_ready((y16, loss16))
    np.testing.assert_allclose(np.asarray(y16.astype(jnp.float32)),
                               np.asarray(y_ref), atol=3e-2, rtol=3e-2)
    np.testing.assert_allclose(np.asarray(loss16), np.asarray(loss_ref),
                               atol=3e-2, rtol=3e-2)

    # ---- batch-tiled pipeline (forced: B=28 with 8-row tiles + row masking) -
    B2 = 28
    x2 = jax.random.normal(kx2, (B2, INPUT_DIM), jnp.float32)
    y2_ref, loss2_ref = _reference(x2, params)
    y2, loss2 = linear_autoencoder_last(x2, prepped_f32, block_rows=8)
    jax.block_until_ready((y2, loss2))
    np.testing.assert_allclose(np.asarray(y2), np.asarray(y2_ref),
                               atol=1e-4, rtol=1e-4)
    np.testing.assert_allclose(np.asarray(loss2), np.asarray(loss2_ref),
                               atol=1e-4, rtol=1e-4)

    y2_only = linear_autoencoder_last(x2, prepped_f32, is_reconstruct=False,
                                      block_rows=8)
    jax.block_until_ready(y2_only)
    np.testing.assert_allclose(np.asarray(y2_only), np.asarray(y2_ref),
                               atol=1e-4, rtol=1e-4)

    print("KERNEL_OK")
</pallas_src>

<mosaic_0001>
module attributes {stable_mosaic.version = 11 : i64} {
  func.func @_fused_full_kernel(%arg0: memref<8x128xf32, #tpu.memory_space<vmem>>, %arg1: memref<128x128xf32, #tpu.memory_space<vmem>>, %arg2: memref<1x128xf32, #tpu.memory_space<vmem>>, %arg3: memref<1x128xf32, #tpu.memory_space<vmem>>, %arg4: memref<1x128xf32, #tpu.memory_space<vmem>>, %arg5: memref<128x128xf32, #tpu.memory_space<vmem>>, %arg6: memref<1x128xf32, #tpu.memory_space<vmem>>, %arg7: memref<1x128xf32, #tpu.memory_space<vmem>>, %arg8: memref<1x128xf32, #tpu.memory_space<vmem>>, %arg9: memref<8x128xf32, #tpu.memory_space<vmem>>, %arg10: memref<1x1xf32, #tpu.memory_space<vmem>>) attributes {dimension_semantics = [], scalar_prefetch = 0 : i64, scratch_operands = 0 : i64, tpu.core_type = #tpu.core_type<tc>} {
    %c0 = arith.constant 0 : index
    %c0_0 = arith.constant 0 : index
    %0 = vector.load %arg0[%c0, %c0_0] : memref<8x128xf32, #tpu.memory_space<vmem>>, vector<8x128xf32>
    %c0_1 = arith.constant 0 : index
    %c0_2 = arith.constant 0 : index
    %1 = vector.load %arg1[%c0_1, %c0_2] : memref<128x128xf32, #tpu.memory_space<vmem>>, vector<128x128xf32>
    %cst = arith.constant dense<0.000000e+00> : vector<8x128xf32>
    %2 = tpu.matmul %0, %1, %cst {dimension_numbers = #tpu.dot_dimension_numbers<[1], [0], [0], [1], [0, 0, 1, 1], [], []>} : vector<8x128xf32>, vector<128x128xf32>, vector<8x128xf32> -> vector<8x128xf32>
    %c0_3 = arith.constant 0 : index
    %c0_4 = arith.constant 0 : index
    %3 = vector.load %arg2[%c0_3, %c0_4] : memref<1x128xf32, #tpu.memory_space<vmem>>, vector<1x128xf32>
    %4 = vector.broadcast %3 : vector<1x128xf32> to vector<8x128xf32>
    %5 = arith.addf %2, %4 : vector<8x128xf32>
    %cst_5 = arith.constant dense<0.000000e+00> : vector<128xf32>
    %6 = vector.multi_reduction <add>, %5, %cst_5 [0] : vector<8x128xf32> to vector<128xf32>
    %7 = vector.shape_cast %6 : vector<128xf32> to vector<1x128xf32>
    %cst_6 = arith.constant 1.250000e-01 : f32
    %8 = vector.broadcast %cst_6 : f32 to vector<1x128xf32>
    %9 = arith.mulf %7, %8 : vector<1x128xf32>
    %10 = vector.broadcast %9 : vector<1x128xf32> to vector<8x128xf32>
    %11 = arith.subf %5, %10 : vector<8x128xf32>
    %12 = arith.mulf %11, %11 : vector<8x128xf32>
    %cst_7 = arith.constant dense<0.000000e+00> : vector<128xf32>
    %13 = vector.multi_reduction <add>, %12, %cst_7 [0] : vector<8x128xf32> to vector<128xf32>
    %14 = vector.shape_cast %13 : vector<128xf32> to vector<1x128xf32>
    %cst_8 = arith.constant 1.250000e-01 : f32
    %15 = vector.broadcast %cst_8 : f32 to vector<1x128xf32>
    %16 = arith.mulf %14, %15 : vector<1x128xf32>
    %c0_9 = arith.constant 0 : index
    %c0_10 = arith.constant 0 : index
    %17 = vector.load %arg3[%c0_9, %c0_10] : memref<1x128xf32, #tpu.memory_space<vmem>>, vector<1x128xf32>
    %cst_11 = arith.constant 9.99999974E-6 : f32
    %18 = vector.broadcast %cst_11 : f32 to vector<1x128xf32>
    %19 = arith.addf %16, %18 : vector<1x128xf32>
    %20 = math.rsqrt %19 : vector<1x128xf32>
    %21 = arith.mulf %17, %20 : vector<1x128xf32>
    %c0_12 = arith.constant 0 : index
    %c0_13 = arith.constant 0 : index
    %22 = vector.load %arg4[%c0_12, %c0_13] : memref<1x128xf32, #tpu.memory_space<vmem>>, vector<1x128xf32>
    %23 = arith.mulf %9, %21 : vector<1x128xf32>
    %24 = arith.subf %22, %23 : vector<1x128xf32>
    %25 = vector.broadcast %21 : vector<1x128xf32> to vector<8x128xf32>
    %26 = arith.mulf %5, %25 : vector<8x128xf32>
    %27 = vector.broadcast %24 : vector<1x128xf32> to vector<8x128xf32>
    %28 = arith.addf %26, %27 : vector<8x128xf32>
    %29 = math.tanh %28 : vector<8x128xf32>
    %c0_14 = arith.constant 0 : index
    %c0_15 = arith.constant 0 : index
    %30 = vector.load %arg9[%c0_14, %c0_15] : memref<8x128xf32, #tpu.memory_space<vmem>>, vector<8x128xf32>
    tpu.vector_store %arg9[%c0_14, %c0_15], %29 {strides = array<i32>} : memref<8x128xf32, #tpu.memory_space<vmem>>, vector<8x128xf32>,
    %c0_16 = arith.constant 0 : index
    %c0_17 = arith.constant 0 : index
    %31 = vector.load %arg5[%c0_16, %c0_17] : memref<128x128xf32, #tpu.memory_space<vmem>>, vector<128x128xf32>
    %cst_18 = arith.constant dense<0.000000e+00> : vector<8x128xf32>
    %32 = tpu.matmul %29, %31, %cst_18 {dimension_numbers = #tpu.dot_dimension_numbers<[1], [0], [0], [1], [0, 0, 1, 1], [], []>} : vector<8x128xf32>, vector<128x128xf32>, vector<8x128xf32> -> vector<8x128xf32>
    %c0_19 = arith.constant 0 : index
    %c0_20 = arith.constant 0 : index
    %33 = vector.load %arg6[%c0_19, %c0_20] : memref<1x128xf32, #tpu.memory_space<vmem>>, vector<1x128xf32>
    %34 = vector.broadcast %33 : vector<1x128xf32> to vector<8x128xf32>
    %35 = arith.addf %32, %34 : vector<8x128xf32>
    %cst_21 = arith.constant dense<0.000000e+00> : vector<128xf32>
    %36 = vector.multi_reduction <add>, %35, %cst_21 [0] : vector<8x128xf32> to vector<128xf32>
    %37 = vector.shape_cast %36 : vector<128xf32> to vector<1x128xf32>
    %cst_22 = arith.constant 1.250000e-01 : f32
    %38 = vector.broadcast %cst_22 : f32 to vector<1x128xf32>
    %39 = arith.mulf %37, %38 : vector<1x128xf32>
    %40 = vector.broadcast %39 : vector<1x128xf32> to vector<8x128xf32>
    %41 = arith.subf %35, %40 : vector<8x128xf32>
    %42 = arith.mulf %41, %41 : vector<8x128xf32>
    %cst_23 = arith.constant dense<0.000000e+00> : vector<128xf32>
    %43 = vector.multi_reduction <add>, %42, %cst_23 [0] : vector<8x128xf32> to vector<128xf32>
    %44 = vector.shape_cast %43 : vector<128xf32> to vector<1x128xf32>
    %cst_24 = arith.constant 1.250000e-01 : f32
    %45 = vector.broadcast %cst_24 : f32 to vector<1x128xf32>
    %46 = arith.mulf %44, %45 : vector<1x128xf32>
    %c0_25 = arith.constant 0 : index
    %c0_26 = arith.constant 0 : index
    %47 = vector.load %arg7[%c0_25, %c0_26] : memref<1x128xf32, #tpu.memory_space<vmem>>, vector<1x128xf32>
    %cst_27 = arith.constant 9.99999974E-6 : f32
    %48 = vector.broadcast %cst_27 : f32 to vector<1x128xf32>
    %49 = arith.addf %46, %48 : vector<1x128xf32>
    %50 = math.rsqrt %49 : vector<1x128xf32>
    %51 = arith.mulf %47, %50 : vector<1x128xf32>
    %c0_28 = arith.constant 0 : index
    %c0_29 = arith.constant 0 : index
    %52 = vector.load %arg8[%c0_28, %c0_29] : memref<1x128xf32, #tpu.memory_space<vmem>>, vector<1x128xf32>
    %53 = arith.mulf %39, %51 : vector<1x128xf32>
    %54 = arith.subf %52, %53 : vector<1x128xf32>
    %55 = vector.broadcast %51 : vector<1x128xf32> to vector<8x128xf32>
    %56 = arith.mulf %35, %55 : vector<8x128xf32>
    %57 = vector.broadcast %54 : vector<1x128xf32> to vector<8x128xf32>
    %58 = arith.addf %56, %57 : vector<8x128xf32>
    %59 = math.tanh %58 : vector<8x128xf32>
    %c0_30 = arith.constant 0 : index
    %c0_31 = arith.constant 0 : index
    %60 = vector.load %arg0[%c0_30, %c0_31] : memref<8x128xf32, #tpu.memory_space<vmem>>, vector<8x128xf32>
    %61 = arith.subf %59, %60 : vector<8x128xf32>
    %62 = arith.mulf %61, %61 : vector<8x128xf32>
    %63 = vector.shape_cast %62 : vector<8x128xf32> to vector<1x8x128xf32>
    %cst_32 = arith.constant dense<0.000000e+00> : vector<1xf32>
    %64 = vector.multi_reduction <add>, %63, %cst_32 [1, 2] : vector<1x8x128xf32> to vector<1xf32>
    %65 = vector.shape_cast %64 : vector<1xf32> to vector<1x1x1xf32>
    %66 = vector.extract %65[0, 0, 0] : f32 from vector<1x1x1xf32>
    %cst_33 = arith.constant 9.765625E-4 : f32
    %67 = arith.mulf %66, %cst_33 : f32
    %68 = vector.broadcast %67 : f32 to vector<1x1xf32>
    %c0_34 = arith.constant 0 : index
    %c0_35 = arith.constant 0 : index
    %69 = vector.load %arg10[%c0_34, %c0_35] : memref<1x1xf32, #tpu.memory_space<vmem>>, vector<1x1xf32>
    tpu.vector_store %arg10[%c0_34, %c0_35], %68 {strides = array<i32>} : memref<1x1xf32, #tpu.memory_space<vmem>>, vector<1x1xf32>,
    return
  }
}

</mosaic_0001>

<llo_original>
// kernel: tpu_custom_call.1
$region0: #{tpu_custom_call.1}
  #allocation0 [shape = 'u32[]', space=smem, size = 0x4, offset = 0x4, fixed_abs, tag = 'smem constant byte address 0x4 - core index']
  #allocation1 [shape = 'u32[144,128]{1,0:T(1,128)}', space=vmem, size = 0x12000, scoped, tag = 'internal scratch']
  %s0 = inlined_call_operand.hbm [shape: f32[8,128], index: 0, kind: input, shape index: {}]
  %s1 = inlined_call_operand.hbm [shape: f32[128,128], index: 1, kind: input, shape index: {}]
  %s2 = inlined_call_operand.vmem [shape: f32[1,128], index: 2, kind: input, shape index: {}]
  %s3 = inlined_call_operand.vmem [shape: f32[1,128], index: 3, kind: input, shape index: {}]
  %s4 = inlined_call_operand.vmem [shape: f32[1,128], index: 4, kind: input, shape index: {}]
  %s5 = inlined_call_operand.hbm [shape: f32[128,128], index: 5, kind: input, shape index: {}]
  %s6 = inlined_call_operand.vmem [shape: f32[1,128], index: 6, kind: input, shape index: {}]
  %s7 = inlined_call_operand.vmem [shape: f32[1,128], index: 7, kind: input, shape index: {}]
  %s8 = inlined_call_operand.vmem [shape: f32[1,128], index: 8, kind: input, shape index: {}]
  %s9 = inlined_call_operand.hbm [shape: f32[8,128], index: 9, kind: output, shape index: {0}]
  %s10 = inlined_call_operand.hbm [shape: f32[1,1], index: 10, kind: output, shape index: {1}]
  %11 = xla_tuple %s9, %s10
  %s12 = sld [smem:[#allocation0]]
  $region66: #{tpu_custom_call.1} parent=0
    _
  %s14 = ssub.s32 1, %s12
  %s15 = scalar_select 0, %s14, %s12
  $region1: #{tpu_custom_call.1} parent=0
    #allocation2 [shape = 'u8[4096]{0}', space=vmem, size = 0x1000, scoped, tag = 'input window, operand 0, single buffered']
    #allocation3 [shape = 's32[1]{0}', space=sflag, size = 0x4, scoped, tag = 'scoped memory for tpu_custom_call.1']
    #allocation4 [shape = 's32[1]{0}', space=sflag, size = 0x4, scoped, tag = 'scoped memory for tpu_custom_call.1']
    #allocation5 [shape = 'u8[65536]{0}', space=vmem, size = 0x10000, scoped, tag = 'input window, operand 1, single buffered']
    #allocation6 [shape = 's32[1]{0}', space=sflag, size = 0x4, scoped, tag = 'scoped memory for tpu_custom_call.1']
    #allocation7 [shape = 'u8[65536]{0}', space=vmem, size = 0x10000, scoped, tag = 'input window, operand 5, single buffered']
    #allocation8 [shape = 'u8[4096]{0}', space=vmem, size = 0x1000, scoped, tag = 'output window, operand 0, single buffered']
    #allocation9 [shape = 'u8[512]{0}', space=vmem, size = 0x400, scoped, tag = 'output window, operand 1, single buffered']
    #allocation10 [shape = 's32[1]{0}', space=sflag, size = 0x4, scoped, tag = 'scoped memory for tpu_custom_call.1']
    %16 = vsyncpa [#allocation3], 0
    %17 = vsyncpa [#allocation6], 0
    %18 = vsyncpa [#allocation4], 0
    %19 = vsyncpa [#allocation10], 0
    // Predicated region
    $region2: #{tpu_custom_call.1} parent=1 // pred_check
      _
    $region3: #{tpu_custom_call.1} parent=1 // pred_check_branch
      %21 = sbr.rel (0) target = $region5
    $region4: #{tpu_custom_call.1} parent=1 // pred_region
      %s23 = ssub.s32 128, 128
      %24 = vsyncadd [#allocation3], %s23
      %s26 = sshll.u32 [#allocation2], 4
      %s27 = int_to_ptr.vmem [resolvable:$true] %s26
      %29 = dma.hbm_to_vmem [thread:$0]  %s0, 128, %s27, [#allocation3]
    $region5: #{tpu_custom_call.1} parent=1 // pred_fallthru
      _
    // Predicated region
    $region6: #{tpu_custom_call.1} parent=1 // pred_check
      _
    $region7: #{tpu_custom_call.1} parent=1 // pred_check_branch
      %31 = sbr.rel (0) target = $region9
    $region8: #{tpu_custom_call.1} parent=1 // pred_region
      %s33 = ssub.s32 2048, 2048
      %34 = vsyncadd [#allocation6], %s33
      %s35 = sshll.u32 [#allocation5], 4
      %s36 = int_to_ptr.vmem [resolvable:$true] %s35
      %41 = dma.hbm_to_vmem [thread:$0]  %s1, 2048, %s36, [#allocation6], 128, 128, 8
    $region9: #{tpu_custom_call.1} parent=1 // pred_fallthru
      _
    // Predicated region
    $region10: #{tpu_custom_call.1} parent=1 // pred_check
      _
    $region11: #{tpu_custom_call.1} parent=1 // pred_check_branch
      %43 = sbr.rel (0) target = $region13
    $region12: #{tpu_custom_call.1} parent=1 // pred_region
      _
    $region13: #{tpu_custom_call.1} parent=1 // pred_fallthru
      _
    // Predicated region
    $region14: #{tpu_custom_call.1} parent=1 // pred_check
      _
    $region15: #{tpu_custom_call.1} parent=1 // pred_check_branch
      %45 = sbr.rel (0) target = $region17
    $region16: #{tpu_custom_call.1} parent=1 // pred_region
      _
    $region17: #{tpu_custom_call.1} parent=1 // pred_fallthru
      _
    // Predicated region
    $region18: #{tpu_custom_call.1} parent=1 // pred_check
      _
    $region19: #{tpu_custom_call.1} parent=1 // pred_check_branch
      %47 = sbr.rel (0) target = $region21
    $region20: #{tpu_custom_call.1} parent=1 // pred_region
      _
    $region21: #{tpu_custom_call.1} parent=1 // pred_fallthru
      _
    // Predicated region
    $region22: #{tpu_custom_call.1} parent=1 // pred_check
      _
    $region23: #{tpu_custom_call.1} parent=1 // pred_check_branch
      %49 = sbr.rel (0) target = $region25
    $region24: #{tpu_custom_call.1} parent=1 // pred_region
      %s51 = ssub.s32 2048, 2048
      %52 = vsyncadd [#allocation6], %s51
      %s53 = sshll.u32 [#allocation7], 4
      %s54 = int_to_ptr.vmem [resolvable:$true] %s53
      %59 = dma.hbm_to_vmem [thread:$0]  %s5, 2048, %s54, [#allocation6], 128, 128, 8
    $region25: #{tpu_custom_call.1} parent=1 // pred_fallthru
      _
    // Predicated region
    $region26: #{tpu_custom_call.1} parent=1 // pred_check
      _
    $region27: #{tpu_custom_call.1} parent=1 // pred_check_branch
      %61 = sbr.rel (0) target = $region29
    $region28: #{tpu_custom_call.1} parent=1 // pred_region
      _
    $region29: #{tpu_custom_call.1} parent=1 // pred_fallthru
      _
    // Predicated region
    $region30: #{tpu_custom_call.1} parent=1 // pred_check
      _
    $region31: #{tpu_custom_call.1} parent=1 // pred_check_branch
      %63 = sbr.rel (0) target = $region33
    $region32: #{tpu_custom_call.1} parent=1 // pred_region
      _
    $region33: #{tpu_custom_call.1} parent=1 // pred_fallthru
      _
    // Predicated region
    $region34: #{tpu_custom_call.1} parent=1 // pred_check
      _
    $region35: #{tpu_custom_call.1} parent=1 // pred_check_branch
      %65 = sbr.rel (0) target = $region37
    $region36: #{tpu_custom_call.1} parent=1 // pred_region
      _
    $region37: #{tpu_custom_call.1} parent=1 // pred_fallthru
      _
    // Predicated region
    $region38: #{tpu_custom_call.1} parent=1 // pred_check
      _
    $region39: #{tpu_custom_call.1} parent=1 // pred_check_branch
      %67 = sbr.rel (0) target = $region41
    $region40: #{tpu_custom_call.1} parent=1 // pred_region
      %68 = dma.done [#allocation3], 128
    $region41: #{tpu_custom_call.1} parent=1 // pred_fallthru
      _
    // Predicated region
    $region42: #{tpu_custom_call.1} parent=1 // pred_check
      _
    $region43: #{tpu_custom_call.1} parent=1 // pred_check_branch
      %70 = sbr.rel (0) target = $region45
    $region44: #{tpu_custom_call.1} parent=1 // pred_region
      %71 = dma.done [#allocation6], 2048
    $region45: #{tpu_custom_call.1} parent=1 // pred_fallthru
      _
    // Predicated region
    $region46: #{tpu_custom_call.1} parent=1 // pred_check
      _
    $region47: #{tpu_custom_call.1} parent=1 // pred_check_branch
      %73 = sbr.rel (0) target = $region49
    $region48: #{tpu_custom_call.1} parent=1 // pred_region
      %74 = dma.done [#allocation6], 2048
    $region49: #{tpu_custom_call.1} parent=1 // pred_fallthru
      _
    %v75 = vld [vmem:[#allocation2] sm:$0xff]
    %v76 = vld [vmem:[#allocation5] sm:$0xff]
    %v77 = vld [vmem:[#allocation5 + $0x8] sm:$0xff]
    %v78 = vld [vmem:[#allocation5 + $0x10] sm:$0xff]
    %v79 = vld [vmem:[#allocation5 + $0x18] sm:$0xff]
    %v80 = vld [vmem:[#allocation5 + $0x20] sm:$0xff]
    %v81 = vld [vmem:[#allocation5 + $0x28] sm:$0xff]
    %v82 = vld [vmem:[#allocation5 + $0x30] sm:$0xff]
    %v83 = vld [vmem:[#allocation5 + $0x38] sm:$0xff]
    %v84 = vld [vmem:[#allocation5 + $0x40] sm:$0xff]
    %v85 = vld [vmem:[#allocation5 + $0x48] sm:$0xff]
    %v86 = vld [vmem:[#allocation5 + $0x50] sm:$0xff]
    %v87 = vld [vmem:[#allocation5 + $0x58] sm:$0xff]
    %v88 = vld [vmem:[#allocation5 + $0x60] sm:$0xff]
    %v89 = vld [vmem:[#allocation5 + $0x68] sm:$0xff]
    %v90 = vld [vmem:[#allocation5 + $0x70] sm:$0xff]
    %v91 = vld [vmem:[#allocation5 + $0x78] sm:$0xff]
    %v92 = vld [vmem:[%s2] sm:$0x1]
    %v94 = vlaneseq
    %v95 = vshrl.u32 %v94, 7
    %v96 = vsub.s32 0, %v95
    %v97 = vrot.slane %v92, %v96
    %99 = vmatprep.subr.mxu0 0.0
    %100 = vmatpush1.msra.mxu0 %v76
    %101 = vmatprep.subr.mxu0 0.0
    %102 = vmatpush1.msra.mxu0 %v77
    %103 = vmatprep.subr.mxu0 0.0
    %104 = vmatpush1.msra.mxu0 %v78
    %105 = vmatprep.subr.mxu0 0.0
    %106 = vmatpush1.msra.mxu0 %v79
    %107 = vmatprep.subr.mxu0 0.0
    %108 = vmatpush1.msra.mxu0 %v80
    %109 = vmatprep.subr.mxu0 0.0
    %110 = vmatpush1.msra.mxu0 %v81
    %111 = vmatprep.subr.mxu0 0.0
    %112 = vmatpush1.msra.mxu0 %v82
    %113 = vmatprep.subr.mxu0 0.0
    %114 = vmatpush1.msra.mxu0 %v83
    %115 = vmatprep.subr.mxu0 0.0
    %116 = vmatpush1.msra.mxu0 %v84
    %117 = vmatprep.subr.mxu0 0.0
    %118 = vmatpush1.msra.mxu0 %v85
    %119 = vmatprep.subr.mxu0 0.0
    %120 = vmatpush1.msra.mxu0 %v86
    %121 = vmatprep.subr.mxu0 0.0
    %122 = vmatpush1.msra.mxu0 %v87
    %123 = vmatprep.subr.mxu0 0.0
    %124 = vmatpush1.msra.mxu0 %v88
    %125 = vmatprep.subr.mxu0 0.0
    %126 = vmatpush1.msra.mxu0 %v89
    %127 = vmatprep.subr.mxu0 0.0
    %128 = vmatpush1.msra.mxu0 %v90
    %129 = vmatprep.subr.mxu0 0.0
    %130 = vmatpush1.msra.mxu0 %v91
    %131 = vmatprep.subr.mxu0 0.0
    %132 = vmatpush1.msra.mxu0 0.0
    %133 = vmatprep.subr.mxu0 0.0
    %134 = vmatpush1.msra.mxu0 0.0
    %135 = vmatprep.subr.mxu0 0.0
    %136 = vmatpush1.msra.mxu0 0.0
    %137 = vmatprep.subr.mxu0 0.0
    %138 = vmatpush1.msra.mxu0 0.0
    %139 = vmatprep.subr.mxu0 0.0
    %140 = vmatpush1.msra.mxu0 0.0
    %141 = vmatprep.subr.mxu0 0.0
    %142 = vmatpush1.msra.mxu0 0.0
    %143 = vmatprep.subr.mxu0 0.0
    %144 = vmatpush1.msra.mxu0 0.0
    %145 = vmatprep.subr.mxu0 0.0
    %146 = vmatpush1.msra.mxu0 0.0
    %147 = vmatprep.subr.mxu0 0.0
    %148 = vmatpush1.msra.mxu0 0.0
    %149 = vmatprep.subr.mxu0 0.0
    %150 = vmatpush1.msra.mxu0 0.0
    %151 = vmatprep.subr.mxu0 0.0
    %152 = vmatpush1.msra.mxu0 0.0
    %153 = vmatprep.subr.mxu0 0.0
    %154 = vmatpush1.msra.mxu0 0.0
    %155 = vmatprep.subr.mxu0 0.0
    %156 = vmatpush1.msra.mxu0 0.0
    %157 = vmatprep.subr.mxu0 0.0
    %158 = vmatpush1.msra.mxu0 0.0
    %159 = vmatprep.subr.mxu0 0.0
    %160 = vmatpush1.msra.mxu0 0.0
    %161 = vmatprep.subr.mxu0 0.0
    %162 = vmatpush1.msra.mxu0 0.0
    %163 = vmatprep.mubr.f32.mxu0 0.0
    %164 = vmatmul.mubr.f32.gmra.mrb[0].mxu0 %v75
    %v165 = vpop.f32.mrb[0].mxu0
    %v166 = vadd.f32 %v97, %v165
    %v167 = vpop.f32.mrb[0].mxu0
    %168 = vdwg.mxu0
    %v169 = vrot.slane %v166, 4
    %v170 = vadd.f32 %v166, %v169
    %v171 = vrot.slane %v170, 2
    %v172 = vadd.f32 %v170, %v171
    %v173 = vrot.slane %v172, 1
    %v174 = vadd.f32 %v172, %v173
    %v175 = vmul.f32 %v174, 0.125
    %v176 = vsub.f32 %v166, %v175
    %v177 = vmul.f32 %v176, %v176
    %v178 = vrot.slane %v177, 4
    %v179 = vadd.f32 %v177, %v178
    %v180 = vrot.slane %v179, 2
    %v181 = vadd.f32 %v179, %v180
    %v182 = vrot.slane %v181, 1
    %v183 = vadd.f32 %v181, %v182
    %v184 = vmul.f32 %v183, 0.125
    %v185 = vld [vmem:[%s3] sm:$0x1]
    %v186 = vadd.f32 %v184, 1e-05
    %v187 = vrsqrt.pop %v186
    %v188 = vmul.f32 %v185, %v187
    %v189 = vld [vmem:[%s4] sm:$0x1]
    %v190 = vmul.f32 %v175, %v188
    %v191 = vsub.f32 %v189, %v190
    %v193 = vlaneseq
    %v194 = vshrl.u32 %v193, 7
    %v195 = vsub.s32 0, %v194
    %v196 = vrot.slane %v188, %v195
    %v198 = vmul.f32 %v166, %v196
    %v200 = vlaneseq
    %v201 = vshrl.u32 %v200, 7
    %v202 = vsub.s32 0, %v201
    %v203 = vrot.slane %v191, %v202
    %v205 = vadd.f32 %v198, %v203
    %v206 = vtanh.pop %v205
    %207 = vst [vmem:[#allocation8] sm:$0xff] %v206
    %v208 = vld [vmem:[#allocation7] sm:$0xff]
    %v209 = vld [vmem:[#allocation7 + $0x8] sm:$0xff]
    %v210 = vld [vmem:[#allocation7 + $0x10] sm:$0xff]
    %v211 = vld [vmem:[#allocation7 + $0x18] sm:$0xff]
    %v212 = vld [vmem:[#allocation7 + $0x20] sm:$0xff]
    %v213 = vld [vmem:[#allocation7 + $0x28] sm:$0xff]
    %v214 = vld [vmem:[#allocation7 + $0x30] sm:$0xff]
    %v215 = vld [vmem:[#allocation7 + $0x38] sm:$0xff]
    %v216 = vld [vmem:[#allocation7 + $0x40] sm:$0xff]
    %v217 = vld [vmem:[#allocation7 + $0x48] sm:$0xff]
    %v218 = vld [vmem:[#allocation7 + $0x50] sm:$0xff]
    %v219 = vld [vmem:[#allocation7 + $0x58] sm:$0xff]
    %v220 = vld [vmem:[#allocation7 + $0x60] sm:$0xff]
    %v221 = vld [vmem:[#allocation7 + $0x68] sm:$0xff]
    %v222 = vld [vmem:[#allocation7 + $0x70] sm:$0xff]
    %v223 = vld [vmem:[#allocation7 + $0x78] sm:$0xff]
    %v224 = vld [vmem:[%s6] sm:$0x1]
    %v226 = vlaneseq
    %v227 = vshrl.u32 %v226, 7
    %v228 = vsub.s32 0, %v227
    %v229 = vrot.slane %v224, %v228
    %231 = vmatprep.subr.mxu0 0.0
    %232 = vmatpush1.msra.mxu0 %v208
    %233 = vmatprep.subr.mxu0 0.0
    %234 = vmatpush1.msra.mxu0 %v209
    %235 = vmatprep.subr.mxu0 0.0
    %236 = vmatpush1.msra.mxu0 %v210
    %237 = vmatprep.subr.mxu0 0.0
    %238 = vmatpush1.msra.mxu0 %v211
    %239 = vmatprep.subr.mxu0 0.0
    %240 = vmatpush1.msra.mxu0 %v212
    %241 = vmatprep.subr.mxu0 0.0
    %242 = vmatpush1.msra.mxu0 %v213
    %243 = vmatprep.subr.mxu0 0.0
    %244 = vmatpush1.msra.mxu0 %v214
    %245 = vmatprep.subr.mxu0 0.0
    %246 = vmatpush1.msra.mxu0 %v215
    %247 = vmatprep.subr.mxu0 0.0
    %248 = vmatpush1.msra.mxu0 %v216
    %249 = vmatprep.subr.mxu0 0.0
    %250 = vmatpush1.msra.mxu0 %v217
    %251 = vmatprep.subr.mxu0 0.0
    %252 = vmatpush1.msra.mxu0 %v218
    %253 = vmatprep.subr.mxu0 0.0
    %254 = vmatpush1.msra.mxu0 %v219
    %255 = vmatprep.subr.mxu0 0.0
    %256 = vmatpush1.msra.mxu0 %v220
    %257 = vmatprep.subr.mxu0 0.0
    %258 = vmatpush1.msra.mxu0 %v221
    %259 = vmatprep.subr.mxu0 0.0
    %260 = vmatpush1.msra.mxu0 %v222
    %261 = vmatprep.subr.mxu0 0.0
    %262 = vmatpush1.msra.mxu0 %v223
    %263 = vmatprep.subr.mxu0 0.0
    %264 = vmatpush1.msra.mxu0 0.0
    %265 = vmatprep.subr.mxu0 0.0
    %266 = vmatpush1.msra.mxu0 0.0
    %267 = vmatprep.subr.mxu0 0.0
    %268 = vmatpush1.msra.mxu0 0.0
    %269 = vmatprep.subr.mxu0 0.0
    %270 = vmatpush1.msra.mxu0 0.0
    %271 = vmatprep.subr.mxu0 0.0
    %272 = vmatpush1.msra.mxu0 0.0
    %273 = vmatprep.subr.mxu0 0.0
    %274 = vmatpush1.msra.mxu0 0.0
    %275 = vmatprep.subr.mxu0 0.0
    %276 = vmatpush1.msra.mxu0 0.0
    %277 = vmatprep.subr.mxu0 0.0
    %278 = vmatpush1.msra.mxu0 0.0
    %279 = vmatprep.subr.mxu0 0.0
    %280 = vmatpush1.msra.mxu0 0.0
    %281 = vmatprep.subr.mxu0 0.0
    %282 = vmatpush1.msra.mxu0 0.0
    %283 = vmatprep.subr.mxu0 0.0
    %284 = vmatpush1.msra.mxu0 0.0
    %285 = vmatprep.subr.mxu0 0.0
    %286 = vmatpush1.msra.mxu0 0.0
    %287 = vmatprep.subr.mxu0 0.0
    %288 = vmatpush1.msra.mxu0 0.0
    %289 = vmatprep.subr.mxu0 0.0
    %290 = vmatpush1.msra.mxu0 0.0
    %291 = vmatprep.subr.mxu0 0.0
    %292 = vmatpush1.msra.mxu0 0.0
    %293 = vmatprep.subr.mxu0 0.0
    %294 = vmatpush1.msra.mxu0 0.0
    %295 = vmatprep.mubr.f32.mxu0 0.0
    %296 = vmatmul.mubr.f32.gmra.mrb[0].mxu0 %v206
    %v297 = vpop.f32.mrb[0].mxu0
    %v298 = vadd.f32 %v229, %v297
    %v299 = vpop.f32.mrb[0].mxu0
    %300 = vdwg.mxu0
    %v301 = vrot.slane %v298, 4
    %v302 = vadd.f32 %v298, %v301
    %v303 = vrot.slane %v302, 2
    %v304 = vadd.f32 %v302, %v303
    %v305 = vrot.slane %v304, 1
    %v306 = vadd.f32 %v304, %v305
    %v307 = vmul.f32 %v306, 0.125
    %v308 = vsub.f32 %v298, %v307
    %v309 = vmul.f32 %v308, %v308
    %v310 = vrot.slane %v309, 4
    %v311 = vadd.f32 %v309, %v310
    %v312 = vrot.slane %v311, 2
    %v313 = vadd.f32 %v311, %v312
    %v314 = vrot.slane %v313, 1
    %v315 = vadd.f32 %v313, %v314
    %v316 = vmul.f32 %v315, 0.125
    %v317 = vld [vmem:[%s7] sm:$0x1]
    %v318 = vadd.f32 %v316, 1e-05
    %v319 = vrsqrt.pop %v318
    %v320 = vmul.f32 %v317, %v319
    %v321 = vld [vmem:[%s8] sm:$0x1]
    %v322 = vmul.f32 %v307, %v320
    %v323 = vsub.f32 %v321, %v322
    %v325 = vlaneseq
    %v326 = vshrl.u32 %v325, 7
    %v327 = vsub.s32 0, %v326
    %v328 = vrot.slane %v320, %v327
    %v330 = vmul.f32 %v298, %v328
    %v332 = vlaneseq
    %v333 = vshrl.u32 %v332, 7
    %v334 = vsub.s32 0, %v333
    %v335 = vrot.slane %v323, %v334
    %v337 = vadd.f32 %v330, %v335
    %v338 = vtanh.pop %v337
    %v339 = vld [vmem:[#allocation2] sm:$0xff]
    %v340 = vsub.f32 %v338, %v339
    %v341 = vmul.f32 %v340, %v340
    %342 = vadd.xlane.f32.xlu0 %v341
    %v343 = vpop.xlane.xlu0 %342
    %v344 = vrot.slane %v343, 4
    %v345 = vadd.f32 %v343, %v344
    %v346 = vrot.slane %v345, 2
    %v347 = vadd.f32 %v345, %v346
    %v348 = vrot.slane %v347, 1
    %v349 = vadd.f32 %v347, %v348
    %s350 = vtos %v349
    %s351 = smul.f32 %s350, 0.0009765625
    %v352 = vstv %s351
    %vm353 = vcmask 0
    %354 = vst.msk [vmem:[#allocation9] sm:$0x1] %vm353, %v352
    // Predicated region
    $region50: #{tpu_custom_call.1} parent=1 // pred_check
      _
    $region51: #{tpu_custom_call.1} parent=1 // pred_check_branch
      %356 = sbr.rel (0) target = $region53
    $region52: #{tpu_custom_call.1} parent=1 // pred_region
      %s358 = ssub.s32 128, 128
      %359 = vsyncadd [#allocation4], %s358
      %s361 = sshll.u32 [#allocation8], 4
      %s362 = int_to_ptr.vmem [resolvable:$true] %s361
      %364 = dma.vmem_to_hbm [thread:$0]  %s362, 128, %s9, [#allocation4]
    $region53: #{tpu_custom_call.1} parent=1 // pred_fallthru
      _
    // Predicated region
    $region54: #{tpu_custom_call.1} parent=1 // pred_check
      _
    $region55: #{tpu_custom_call.1} parent=1 // pred_check_branch
      %366 = sbr.rel (0) target = $region57
    $region56: #{tpu_custom_call.1} parent=1 // pred_region
      %s368 = ssub.s32 16, 16
      %369 = vsyncadd [#allocation10], %s368
      %s371 = sshll.u32 [#allocation9], 4
      %s372 = int_to_ptr.vmem [resolvable:$true] %s371
      %374 = dma.vmem_to_hbm [thread:$0]  %s372, 16, %s10, [#allocation10]
    $region57: #{tpu_custom_call.1} parent=1 // pred_fallthru
      _
    // Predicated region
    $region58: #{tpu_custom_call.1} parent=1 // pred_check
      _
    $region59: #{tpu_custom_call.1} parent=1 // pred_check_branch
      %376 = sbr.rel (0) target = $region61
    $region60: #{tpu_custom_call.1} parent=1 // pred_region
      %377 = dma.done [#allocation4], 128
    $region61: #{tpu_custom_call.1} parent=1 // pred_fallthru
      _
    // Predicated region
    $region62: #{tpu_custom_call.1} parent=1 // pred_check
      _
    $region63: #{tpu_custom_call.1} parent=1 // pred_check_branch
      %379 = sbr.rel (0) target = $region65
    $region64: #{tpu_custom_call.1} parent=1 // pred_region
      %380 = dma.done [#allocation10], 16
    $region65: #{tpu_custom_call.1} parent=1 // pred_fallthru
      _
    %381 = vsyncpa [#allocation3], 1
    %382 = vsyncpa [#allocation6], 1
    %383 = vsyncpa [#allocation4], 1
    %384 = vsyncpa [#allocation10], 1

</llo_original>
